<compile_context>
chip_gen: v5e
topology: v5e:2x2
jax: 0.10.0
libtpu: 0.0.40
codegen_flags: <defaults>
</compile_context>

<pallas_src>
import jax
import jax.numpy as jnp
from jax.experimental import pallas as pl
from jax.experimental.pallas import tpu as pltpu


def _neural_map_kernel(x_ref, w_ref, b_ref, o_ref):
    # x_ref: (TB, D_in), w_ref: (D_in, D_out), b_ref: (1, D_out), o_ref: (TB, D_out)
    x = x_ref[...]
    w = w_ref[...]
    if x.dtype != w.dtype:
        x = x.astype(w.dtype)                       # bf16 operands -> MXU peak
    logits = jnp.dot(x, w, preferred_element_type=jnp.float32)
    logits = logits + b_ref[...].astype(jnp.float32)

    # Numerically stable softmax over dim=1 (whole output axis is in-block).
    m = jnp.max(logits, axis=1, keepdims=True)
    e = jnp.exp(logits - m)
    denom = jnp.sum(e, axis=1, keepdims=True)
    inv = pl.reciprocal(denom, approx=True)          # EUP slot (cheap)
    inv = inv * (2.0 - denom * inv)                  # one Newton step -> ~exact
    o_ref[...] = (e * inv).astype(o_ref.dtype)


def pack_neural_map_params(w, b, matmul_dtype=jnp.bfloat16):
    """One-time packing of nn.Linear params (call at init, not per forward).

    w: (d_out, d_in) torch nn.Linear layout, b: (d_out,).
    Returns (w_packed (d_in, d_out), b_row (1, d_out)).
    """
    w_packed = jnp.asarray(w).T.astype(matmul_dtype)
    b_row = jnp.asarray(b).reshape(1, -1).astype(jnp.float32)
    return w_packed, b_row


def _vmem_budget_bytes():
    try:
        info = pltpu.get_tpu_info()
        cap = int(getattr(info, "vmem_capacity_bytes", 64 * 1024 * 1024))
    except Exception:
        cap = 64 * 1024 * 1024                       # conservative (v7x per-TC)
    return max(int(cap * 0.75), 16 * 1024 * 1024)    # leave headroom


def neural_map(x, w_packed, b_row, *, block_b=None, out_dtype=None):
    """Forward of NeuralMap: softmax(x @ W^T + b, axis=1).

    x: (B, d_in); w_packed: (d_in, d_out) (from pack_neural_map_params);
    b_row: (1, d_out).  Returns (B, d_out) in out_dtype (default: x.dtype).
    """
    B, d_in = x.shape
    d_in_w, d_out = w_packed.shape
    assert d_in == d_in_w, "weight/input dim mismatch"
    out_dtype = x.dtype if out_dtype is None else out_dtype

    budget = _vmem_budget_bytes()
    x_sz = jnp.dtype(x.dtype).itemsize
    w_sz = jnp.dtype(w_packed.dtype).itemsize
    o_sz = jnp.dtype(out_dtype).itemsize

    # Resident weight + bias (pipeline keeps 2 buffers even for a constant
    # index_map) plus double-buffered x/out blocks must fit the VMEM budget.
    resident = 2 * (d_in * d_out * w_sz + d_out * 4)
    per_row = 2 * (d_in * x_sz + d_out * o_sz)

    if block_b is None:
        tb = (budget - resident) // max(per_row, 1)
        tb = max(8, min(tb, 1024))
        tb = min(tb, B)
        # Give the parallel batch axis at least 2 tiles for moderate B so the
        # v7x megacore can shard it across both TensorCores.
        if B >= 256 and tb >= B:
            tb = -(-B // 2)
        if B >= 8:
            tb = max(8, (tb // 8) * 8)
    else:
        tb = min(block_b, B)

    grid = (pl.cdiv(B, tb),)

    return pl.pallas_call(
        _neural_map_kernel,
        out_shape=jax.ShapeDtypeStruct((B, d_out), out_dtype),
        grid=grid,
        in_specs=[
            # x tiles stream along the batch axis (auto double-buffered).
            pl.BlockSpec((tb, d_in), lambda i: (i, 0)),
            # Weight & bias: constant index_map -> VMEM-resident across steps.
            pl.BlockSpec((d_in, d_out), lambda i: (0, 0)),
            pl.BlockSpec((1, d_out), lambda i: (0, 0)),
        ],
        out_specs=pl.BlockSpec((tb, d_out), lambda i: (i, 0)),
        compiler_params=pltpu.CompilerParams(
            dimension_semantics=("parallel",),
            vmem_limit_bytes=int(budget),
        ),
    )(x, w_packed, b_row)


if __name__ == "__main__":
    key = jax.random.PRNGKey(0)
    k_x, k_w, k_b = jax.random.split(key, 3)

    # Small shapes consistent with the module's forward: (batch, input_dim).
    B, input_dim, out_dim = 8, 32, 16

    x = jax.random.normal(k_x, (B, input_dim), dtype=jnp.float32)

    # Deterministic init mimicking nn.Linear's uniform(-1/sqrt(in), 1/sqrt(in)).
    bound = 1.0 / float(input_dim) ** 0.5
    w = jax.random.uniform(k_w, (out_dim, input_dim), jnp.float32, -bound, bound)
    b = jax.random.uniform(k_b, (out_dim,), jnp.float32, -bound, bound)

    # Pack once (transpose + bf16 cast hoisted out of the per-call path).
    w_packed, b_row = pack_neural_map_params(w, b, matmul_dtype=jnp.bfloat16)

    out = neural_map(x, w_packed, b_row)
    out = jax.block_until_ready(out)

    # Reference in plain JAX at highest matmul precision.
    ref = jax.nn.softmax(
        jnp.dot(x, w.T, precision=jax.lax.Precision.HIGHEST) + b, axis=1)

    assert out.shape == (B, out_dim)
    assert bool(jnp.all(jnp.isfinite(out)))
    # Softmax invariant: rows sum to 1 (Newton-refined reciprocal -> ~f32 exact).
    assert jnp.allclose(jnp.sum(out, axis=1), 1.0, atol=1e-3)
    # bf16 matmul operands vs f32 reference: probabilities agree to ~1e-3..1e-2.
    assert jnp.allclose(out, ref, atol=2e-2, rtol=0.0)
    print("KERNEL_OK")
</pallas_src>

<mosaic_0001>
module attributes {stable_mosaic.version = 11 : i64} {
  func.func @_neural_map_kernel(%arg0: i32, %arg1: memref<8x32xf32, #tpu.memory_space<vmem>>, %arg2: memref<32x16xbf16, #tpu.memory_space<vmem>>, %arg3: memref<1x16xf32, #tpu.memory_space<vmem>>, %arg4: memref<8x16xf32, #tpu.memory_space<vmem>>) attributes {dimension_semantics = [#tpu.dimension_semantics<parallel>], iteration_bounds = array<i64: 1>, scalar_prefetch = 0 : i64, scratch_operands = 0 : i64, tpu.core_type = #tpu.core_type<tc>, window_params = [{transform_indices = @transform_0, window_bounds = array<i64: 8, 32>}, {pipeline_mode = #tpu.pipeline_mode<synchronous>, transform_indices = @transform_1, window_bounds = array<i64: 32, 16>}, {pipeline_mode = #tpu.pipeline_mode<synchronous>, transform_indices = @transform_2, window_bounds = array<i64: 1, 16>}, {transform_indices = @transform_3, window_bounds = array<i64: 8, 16>}]} {
    %c0 = arith.constant 0 : index
    %c0_0 = arith.constant 0 : index
    %0 = vector.load %arg1[%c0, %c0_0] : memref<8x32xf32, #tpu.memory_space<vmem>>, vector<8x32xf32>
    %c0_1 = arith.constant 0 : index
    %c0_2 = arith.constant 0 : index
    %1 = vector.load %arg2[%c0_1, %c0_2] : memref<32x16xbf16, #tpu.memory_space<vmem>>, vector<32x16xbf16>
    %2 = arith.truncf %0 : vector<8x32xf32> to vector<8x32xbf16>
    %cst = arith.constant dense<0.000000e+00> : vector<8x16xf32>
    %3 = tpu.matmul %2, %1, %cst {dimension_numbers = #tpu.dot_dimension_numbers<[1], [0], [0], [1], [0, 0, 1, 1], [], []>} : vector<8x32xbf16>, vector<32x16xbf16>, vector<8x16xf32> -> vector<8x16xf32>
    %c0_3 = arith.constant 0 : index
    %c0_4 = arith.constant 0 : index
    %4 = vector.load %arg3[%c0_3, %c0_4] : memref<1x16xf32, #tpu.memory_space<vmem>>, vector<1x16xf32>
    %5 = vector.broadcast %4 : vector<1x16xf32> to vector<8x16xf32>
    %6 = arith.addf %3, %5 : vector<8x16xf32>
    %cst_5 = arith.constant dense<0xFF800000> : vector<8xf32>
    %7 = vector.multi_reduction <maximumf>, %6, %cst_5 [1] : vector<8x16xf32> to vector<8xf32>
    %8 = vector.shape_cast %7 : vector<8xf32> to vector<8x1xf32>
    %9 = vector.broadcast %8 : vector<8x1xf32> to vector<8x16xf32>
    %10 = arith.subf %6, %9 : vector<8x16xf32>
    %11 = math.exp %10 : vector<8x16xf32>
    %cst_6 = arith.constant dense<0.000000e+00> : vector<8xf32>
    %12 = vector.multi_reduction <add>, %11, %cst_6 [1] : vector<8x16xf32> to vector<8xf32>
    %13 = vector.shape_cast %12 : vector<8xf32> to vector<8x1xf32>
    %14 = tpu.reciprocal %13 {approx = true} : vector<8x1xf32> -> vector<8x1xf32>
    %15 = arith.mulf %13, %14 : vector<8x1xf32>
    %cst_7 = arith.constant 2.000000e+00 : f32
    %16 = vector.broadcast %cst_7 : f32 to vector<8x1xf32>
    %17 = arith.subf %16, %15 : vector<8x1xf32>
    %18 = arith.mulf %14, %17 : vector<8x1xf32>
    %19 = vector.broadcast %18 : vector<8x1xf32> to vector<8x16xf32>
    %20 = arith.mulf %11, %19 : vector<8x16xf32>
    %c0_8 = arith.constant 0 : index
    %c0_9 = arith.constant 0 : index
    %21 = vector.load %arg4[%c0_8, %c0_9] : memref<8x16xf32, #tpu.memory_space<vmem>>, vector<8x16xf32>
    tpu.vector_store %arg4[%c0_8, %c0_9], %20 {strides = array<i32>} : memref<8x16xf32, #tpu.memory_space<vmem>>, vector<8x16xf32>,
    return
  }
  func.func @transform_0(%arg0: i32) -> (i32, i32) {
    %c0_i32 = arith.constant 0 : i32
    %c0_i32_0 = arith.constant 0 : i32
    return %arg0, %c0_i32 : i32, i32
  }
  func.func @transform_1(%arg0: i32) -> (i32, i32) {
    %c0_i32 = arith.constant 0 : i32
    %c0_i32_0 = arith.constant 0 : i32
    %c0_i32_1 = arith.constant 0 : i32
    return %c0_i32, %c0_i32_0 : i32, i32
  }
  func.func @transform_2(%arg0: i32) -> (i32, i32) {
    %c0_i32 = arith.constant 0 : i32
    %c0_i32_0 = arith.constant 0 : i32
    %c0_i32_1 = arith.constant 0 : i32
    return %c0_i32, %c0_i32_0 : i32, i32
  }
  func.func @transform_3(%arg0: i32) -> (i32, i32) {
    %c0_i32 = arith.constant 0 : i32
    %c0_i32_0 = arith.constant 0 : i32
    return %arg0, %c0_i32 : i32, i32
  }
}

</mosaic_0001>

<llo_original>
// kernel: tpu_custom_call.1
$region0: #{tpu_custom_call.1}
  #allocation0 [shape = 'u32[]', space=smem, size = 0x4, offset = 0x4, fixed_abs, tag = 'smem constant byte address 0x4 - core index']
  #allocation1 [shape = 'u32[72,128]{1,0:T(1,128)}', space=vmem, size = 0x9000, scoped, tag = 'internal scratch']
  %s0 = inlined_call_operand.vmem [shape: f32[8,32], index: 0, kind: input, shape index: {}]
  %s1 = inlined_call_operand.vmem [shape: bf16[32,16], index: 1, kind: input, shape index: {}]
  %s2 = inlined_call_operand.vmem [shape: f32[1,16], index: 2, kind: input, shape index: {}]
  %s3 = inlined_call_operand.hbm [shape: f32[8,16], index: 3, kind: output, shape index: {}]
  %s4 = sld [smem:[#allocation0]]
  $region22: #{tpu_custom_call.1} parent=0
    _
  %s6 = ssub.s32 1, %s4
  %s7 = scalar_select 0, %s6, %s4
  $region1: #{tpu_custom_call.1} parent=0
    #allocation2 [shape = 'u8[4096]{0}', space=vmem, size = 0x1000, scoped, tag = 'output window, operand 0, single buffered']
    #allocation3 [shape = 's32[1]{0}', space=sflag, size = 0x4, scoped, tag = 'scoped memory for tpu_custom_call.1']
    %8 = vsyncpa [#allocation3], 0
    // Predicated region
    $region2: #{tpu_custom_call.1} parent=1 // pred_check
      _
    $region3: #{tpu_custom_call.1} parent=1 // pred_check_branch
      %10 = sbr.rel (0) target = $region5
    $region4: #{tpu_custom_call.1} parent=1 // pred_region
      _
    $region5: #{tpu_custom_call.1} parent=1 // pred_fallthru
      _
    // Predicated region
    $region6: #{tpu_custom_call.1} parent=1 // pred_check
      _
    $region7: #{tpu_custom_call.1} parent=1 // pred_check_branch
      %12 = sbr.rel (0) target = $region9
    $region8: #{tpu_custom_call.1} parent=1 // pred_region
      _
    $region9: #{tpu_custom_call.1} parent=1 // pred_fallthru
      _
    // Predicated region
    $region10: #{tpu_custom_call.1} parent=1 // pred_check
      _
    $region11: #{tpu_custom_call.1} parent=1 // pred_check_branch
      %14 = sbr.rel (0) target = $region13
    $region12: #{tpu_custom_call.1} parent=1 // pred_region
      _
    $region13: #{tpu_custom_call.1} parent=1 // pred_fallthru
      _
    %v16 = vld [vmem:[%s0] sm:$0xff]
    %v17 = vld [vmem:[%s1] sm:$0xf]
    %v18 = vld [vmem:[%s1 + $0x4] sm:$0xf]
    %v19 = vld [vmem:[%s1 + $0x8] sm:$0xf]
    %v20 = vld [vmem:[%s1 + $0xc] sm:$0xf]
    %v21 = vpack.c.bf16 %v16, %v16
    %v22 = vld [vmem:[%s2] sm:$0x1]
    %v24 = vperm.slane %v22, 0
    %v30 = vunpack.c.l.b16 %v17
    %v31 = vunpack.c.l.b16 %v18
    %v32 = vunpack.c.l.b16 %v19
    %v33 = vunpack.c.l.b16 %v20
    %v34 = vpack.c.b16 %v31, %v30
    %v35 = vpack.c.b16 %v33, %v32
    %vm38 = vcmask 261120
    %v40 = vsel %vm38, %v21, 0
    %42 = vmatpush.bf16.msra.mxu0 0
    %43 = vmatpush.bf16.msra.mxu0 0
    %44 = vmatpush.bf16.msra.mxu0 0
    %45 = vmatpush.bf16.msra.mxu0 0
    %46 = vmatpush.bf16.msra.mxu0 0
    %47 = vmatpush.bf16.msra.mxu0 0
    %48 = vmatpush.bf16.msra.mxu0 %v35
    %49 = vmatpush.bf16.msra.mxu0 %v34
    %50 = vmatmul.bf16.gmra.mxu0 %v40
    %v51 = vpop.f32.mrf.mxu0
    %v52 = vadd.f32 %v24, %v51
    %v53 = vpop.f32.mrf.mxu0
    %54 = vdwg.mxu0
    %vm55 = vcmask 130048
    %v56 = vsel %vm55, %v52, -inf
    %57 = vmax.xlane.f32.xlu0 %v56
    %v58 = vpop.xlane.xlu0 %57
    %v59 = vsub.f32 %v52, %v58
    %v60 = vmul.f32 %v59, 1.442695
    %v61 = vpow.pop %v60
    %v62 = vsel %vm55, %v61, 0.0
    %63 = vadd.xlane.f32.xlu0 %v62
    %v64 = vpop.xlane.xlu0 %63
    %v65 = vrcp.pop %v64
    %v66 = vmul.f32 %v64, %v65
    %v67 = vsub.f32 2.0, %v66
    %v68 = vmul.f32 %v65, %v67
    %v69 = vmul.f32 %v61, %v68
    %70 = vst.msk [vmem:[#allocation2] sm:$0xff] %vm55, %v69
    // Predicated region
    $region14: #{tpu_custom_call.1} parent=1 // pred_check
      _
    $region15: #{tpu_custom_call.1} parent=1 // pred_check_branch
      %72 = sbr.rel (0) target = $region17
    $region16: #{tpu_custom_call.1} parent=1 // pred_region
      %74 = vsyncadd [#allocation3], 0
      %s76 = sshll.u32 [#allocation2], 4
      %s77 = int_to_ptr.vmem [resolvable:$true] %s76
      %s78 = sshll.u32 %s3, 4
      %s79 = int_to_ptr.hbm [resolvable:$true] %s78
      %81 = dma.vmem_to_hbm [thread:$0]  %s77, 128, %s79, [#allocation3]
    $region17: #{tpu_custom_call.1} parent=1 // pred_fallthru
      _
    // Predicated region
    $region18: #{tpu_custom_call.1} parent=1 // pred_check
      _
    $region19: #{tpu_custom_call.1} parent=1 // pred_check_branch
      %83 = sbr.rel (0) target = $region21
    $region20: #{tpu_custom_call.1} parent=1 // pred_region
      %85 = dma.done [#allocation3], 128
    $region21: #{tpu_custom_call.1} parent=1 // pred_fallthru
      _
    %86 = vsyncpa [#allocation3], 1

</llo_original>
